<compile_context>
chip_gen: v5e
topology: v5e:2x2
jax: 0.10.0
libtpu: 0.0.40
codegen_flags: <defaults>
</compile_context>

<pallas_src>
import jax
import jax.numpy as jnp
from jax import lax
from jax.experimental import pallas as pl
from jax.experimental.pallas import tpu as pltpu

LANES = 128
SUBLANES = 8


def _round_up(a, b):
    return ((a + b - 1) // b) * b


def dice_bce_loss_with_logits(inputs, targets, smooth=1.0, *,
                              max_tile_rows=2048, num_cores=1,
                              assume_binary_targets=False):
    """JAX/Pallas equivalent of DiceBCELoss_with_logits.forward.

    num_cores: 1 for v5e/v6e (single TensorCore). Set 2 on v7x to split the
      streaming reduction across both TensorCores (CORE_PARALLEL leading axis).
    assume_binary_targets: if True, skips t==0 / t==1 counting in the hot loop
      and derives the counts from sum(t); only valid for exactly-0/1 targets.
    """
    n = int(inputs.size)
    flat_x = inputs.reshape(-1)          # keep HBM dtype; cast to f32 in VMEM
    flat_t = targets.reshape(-1)

    # ---- geometry -----------------------------------------------------------
    rem = (-n) % LANES
    if rem:
        # TODO(synk): n % 128 != 0 still needs one copy to make the (rows,128)
        # reshape legal; pad elements are masked out in-kernel. Typical NCHW
        # sizes never hit this branch.
        flat_x = jnp.pad(flat_x, (0, rem))
        flat_t = jnp.pad(flat_t, (0, rem))
    rows = (n + rem) // LANES

    num_cores = max(1, int(num_cores))
    rows_per_core = pl.cdiv(rows, num_cores)
    if rows_per_core >= 256:
        chunk_rows = 256
        tile_rows = min(_round_up(int(max_tile_rows), 256),
                        _round_up(rows_per_core, 256))
    else:
        tile_rows = _round_up(rows_per_core, SUBLANES)
        chunk_rows = tile_rows
    nchunks = tile_rows // chunk_rows
    nblocks_data = pl.cdiv(rows, tile_rows)        # blocks that touch real data
    blocks_per_core = pl.cdiv(nblocks_data, num_cores)
    num_stats = 4 if assume_binary_targets else 6  # xt, x, t, bce [, t==0, t==1]

    x2 = flat_x.reshape(rows, LANES)
    t2 = flat_t.reshape(rows, LANES)
    nvalid = jnp.array([n], dtype=jnp.int32)       # scalar-prefetch (SMEM)

    # ---- kernel -------------------------------------------------------------
    def kernel(nvalid_ref, x_ref, t_ref, out_ref, acc_ref):
        c = pl.program_id(0)
        i = pl.program_id(1)

        @pl.when(i == 0)
        def _init():
            acc_ref[...] = jnp.zeros_like(acc_ref)

        gblock = c * blocks_per_core + i
        n_ok = nvalid_ref[0]
        is_full = (gblock + 1) * (tile_rows * LANES) <= n_ok

        def accumulate(masked):
            def body(j, carry):
                r0 = pl.multiple_of(j * chunk_rows, chunk_rows)
                x = x_ref[pl.ds(r0, chunk_rows), :].astype(jnp.float32)
                t = t_ref[pl.ds(r0, chunk_rows), :].astype(jnp.float32)
                xt = x * t
                # numerically stable BCE-with-logits (EUP handles exp/log1p)
                bce = (jnp.maximum(x, 0.0) - xt
                       + jnp.log1p(jnp.exp(-jnp.abs(x))))
                stats = [xt, x, t, bce]
                if not assume_binary_targets:
                    stats.append((t == 0.0).astype(jnp.float32))
                    stats.append((t == 1.0).astype(jnp.float32))
                if masked:
                    row_ids = lax.broadcasted_iota(
                        jnp.int32, (chunk_rows, LANES), 0)
                    lane_ids = lax.broadcasted_iota(
                        jnp.int32, (chunk_rows, LANES), 1)
                    elem = ((gblock * tile_rows + r0 + row_ids) * LANES
                            + lane_ids)
                    valid = elem < n_ok
                    stats = [jnp.where(valid, s, 0.0) for s in stats]
                for k, s in enumerate(stats):
                    acc_ref[k] += s.reshape(-1, SUBLANES, LANES).sum(axis=0)
                return carry

            lax.fori_loop(0, nchunks, body, 0, unroll=True)

        @pl.when(is_full)
        def _fast():                       # hot path: no masking at all
            accumulate(masked=False)

        @pl.when(jnp.logical_not(is_full))
        def _edge():                       # overhanging / partial block only
            accumulate(masked=True)

        @pl.when(i == pl.num_programs(1) - 1)
        def _emit():
            out_ref[0] = acc_ref[...]

    # ---- specs --------------------------------------------------------------
    if num_cores > 1:
        def row_map(c, i, n_ref):
            # Blocks are contiguous per core; clamp a trailing fully-out-of-range
            # block onto a valid tile (its contribution is masked to zero).
            return (jnp.minimum(c * blocks_per_core + i, nblocks_data - 1), 0)
        axis0 = pltpu.CORE_PARALLEL
    else:
        def row_map(c, i, n_ref):
            return (i, 0)
        axis0 = "arbitrary"

    partials = pl.pallas_call(
        kernel,
        out_shape=jax.ShapeDtypeStruct(
            (num_cores, num_stats, SUBLANES, LANES), jnp.float32),
        grid_spec=pltpu.PrefetchScalarGridSpec(
            num_scalar_prefetch=1,
            grid=(num_cores, blocks_per_core),
            in_specs=[
                pl.BlockSpec((tile_rows, LANES), row_map),
                pl.BlockSpec((tile_rows, LANES), row_map),
            ],
            out_specs=pl.BlockSpec((1, num_stats, SUBLANES, LANES),
                                   lambda c, i, n_ref: (c, 0, 0, 0)),
            scratch_shapes=[
                pltpu.VMEM((num_stats, SUBLANES, LANES), jnp.float32)],
        ),
        compiler_params=pltpu.CompilerParams(
            dimension_semantics=(axis0, "arbitrary")),
    )(nvalid, x2, t2)

    # ---- tiny scalar epilogue (combine cores + sublanes + lanes) ------------
    sums = jnp.sum(partials, axis=(0, 2, 3))            # (num_stats,)
    intersection, sum_x, sum_t, sum_bce = sums[0], sums[1], sums[2], sums[3]
    if assume_binary_targets:
        n_one = sum_t
        n_zero = float(n) - sum_t
    else:
        n_zero, n_one = sums[4], sums[5]

    dice_loss = 1.0 - (2.0 * intersection + smooth) / (sum_x + sum_t + smooth)
    # torch passes pos_weight positionally as `weight` (global scalar multiplier)
    weight = n_zero / n_one
    bce = weight * (sum_bce / float(n))
    return bce * 0.5 + dice_loss * 0.5


def _reference(inputs, targets, smooth=1.0):
    """Pure-JAX reference reproducing the PyTorch forward."""
    x = inputs.reshape(-1).astype(jnp.float32)
    t = targets.reshape(-1).astype(jnp.float32)
    intersection = jnp.sum(x * t)
    dice_loss = 1.0 - (2.0 * intersection + smooth) / (jnp.sum(x) + jnp.sum(t) + smooth)
    weight = jnp.sum(t == 0.0).astype(jnp.float32) / jnp.sum(t == 1.0).astype(jnp.float32)
    bce_elem = jnp.maximum(x, 0.0) - x * t + jnp.log1p(jnp.exp(-jnp.abs(x)))
    bce = weight * jnp.mean(bce_elem)
    return bce * 0.5 + dice_loss * 0.5


if __name__ == "__main__":
    key = jax.random.PRNGKey(0)
    k_x, k_t, k_x2, k_t2, k_x3, k_t3 = jax.random.split(key, 6)

    # Module flattens everything, so any NCHW shape works; use (2, 4, 16, 16).
    shape = (2, 4, 16, 16)
    inputs = jax.random.normal(k_x, shape, dtype=jnp.float32)              # logits
    targets = jax.random.bernoulli(k_t, p=0.3, shape=shape).astype(jnp.float32)

    loss = jax.block_until_ready(dice_bce_loss_with_logits(inputs, targets, smooth=1.0))
    ref = _reference(inputs, targets, smooth=1.0)
    assert jnp.allclose(loss, ref, rtol=1e-5, atol=1e-5), (loss, ref)

    # Guarded fast path: binary targets, counts derived from sum(t).
    loss_b = jax.block_until_ready(
        dice_bce_loss_with_logits(inputs, targets, smooth=1.0,
                                  assume_binary_targets=True))
    assert jnp.allclose(loss_b, ref, rtol=1e-5, atol=1e-5), (loss_b, ref)

    # n % 128 != 0 -> exercises the small pad + in-kernel element masking.
    shape2 = (2, 3, 17, 19)
    inputs2 = jax.random.normal(k_x2, shape2, dtype=jnp.float32)
    targets2 = jax.random.bernoulli(k_t2, p=0.4, shape=shape2).astype(jnp.float32)
    loss2 = jax.block_until_ready(dice_bce_loss_with_logits(inputs2, targets2, smooth=1.0))
    ref2 = _reference(inputs2, targets2, smooth=1.0)
    assert jnp.allclose(loss2, ref2, rtol=1e-5, atol=1e-5), (loss2, ref2)

    # n % 128 == 0 but rows % 8 != 0 -> exercises the overhanging-block path
    # (no pad at all; garbage rows masked in-kernel).
    shape3 = (1, 3, 40, 32)
    inputs3 = jax.random.normal(k_x3, shape3, dtype=jnp.float32)
    targets3 = jax.random.bernoulli(k_t3, p=0.25, shape=shape3).astype(jnp.float32)
    loss3 = jax.block_until_ready(dice_bce_loss_with_logits(inputs3, targets3, smooth=1.0))
    ref3 = _reference(inputs3, targets3, smooth=1.0)
    assert jnp.allclose(loss3, ref3, rtol=1e-5, atol=1e-5), (loss3, ref3)

    print("KERNEL_OK")
</pallas_src>

<mosaic_0001>
module attributes {stable_mosaic.version = 11 : i64} {
  func.func @kernel(%arg0: i32, %arg1: i32, %arg2: memref<1xi32, #tpu.memory_space<smem>>, %arg3: memref<16x128xf32, #tpu.memory_space<vmem>>, %arg4: memref<16x128xf32, #tpu.memory_space<vmem>>, %arg5: memref<1x6x8x128xf32, #tpu.memory_space<vmem>>, %arg6: memref<6x8x128xf32, #tpu.memory_space<vmem>>) attributes {dimension_semantics = [#tpu.dimension_semantics<arbitrary>, #tpu.dimension_semantics<arbitrary>], iteration_bounds = array<i64: 1, 1>, scalar_prefetch = 1 : i64, scratch_operands = 1 : i64, tpu.core_type = #tpu.core_type<tc>, window_params = [{transform_indices = @transform_0, window_bounds = array<i64: 16, 128>}, {transform_indices = @transform_1, window_bounds = array<i64: 16, 128>}, {transform_indices = @transform_2, window_bounds = array<i64: 1, 6, 8, 128>}]} {
    %c0_i32 = arith.constant 0 : i32
    %0 = arith.cmpi eq, %arg1, %c0_i32 : i32
    %1 = arith.extui %0 : i1 to i32
    %c0_i32_0 = arith.constant 0 : i32
    %2 = arith.cmpi ne, %1, %c0_i32_0 : i32
    scf.if %2 {
      %cst = arith.constant 0.000000e+00 : f32
      %17 = vector.broadcast %cst : f32 to vector<6x8x128xf32>
      %c0_6 = arith.constant 0 : index
      %c0_7 = arith.constant 0 : index
      %c0_8 = arith.constant 0 : index
      %18 = vector.load %arg6[%c0_6, %c0_7, %c0_8] : memref<6x8x128xf32, #tpu.memory_space<vmem>>, vector<6x8x128xf32>
      tpu.vector_store %arg6[%c0_6, %c0_7, %c0_8], %17 {strides = array<i32>} : memref<6x8x128xf32, #tpu.memory_space<vmem>>, vector<6x8x128xf32>,
    } else {
    }
    %c1_i32 = arith.constant 1 : i32
    %3 = arith.muli %arg0, %c1_i32 : i32
    %4 = arith.addi %3, %arg1 : i32
    %c0 = arith.constant 0 : index
    %5 = memref.load %arg2[%c0] : memref<1xi32, #tpu.memory_space<smem>>
    %c1_i32_1 = arith.constant 1 : i32
    %6 = arith.addi %4, %c1_i32_1 : i32
    %c2048_i32 = arith.constant 2048 : i32
    %7 = arith.muli %6, %c2048_i32 : i32
    %8 = arith.cmpi sle, %7, %5 : i32
    %9 = arith.extui %8 : i1 to i32
    %c0_i32_2 = arith.constant 0 : i32
    %10 = arith.cmpi ne, %9, %c0_i32_2 : i32
    scf.if %10 {
      %c0_i32_6 = arith.constant 0 : i32
      %c16_i32 = arith.constant 16 : i32
      %17 = arith.muli %c0_i32_6, %c16_i32 : i32
      %18 = tpu.assume_multiple %17, 16 : i32
      %19 = arith.index_cast %18 : i32 to index
      %c0_7 = arith.constant 0 : index
      %20 = vector.load %arg3[%19, %c0_7] : memref<16x128xf32, #tpu.memory_space<vmem>>, vector<16x128xf32>
      %21 = arith.index_cast %18 : i32 to index
      %c0_8 = arith.constant 0 : index
      %22 = vector.load %arg4[%21, %c0_8] : memref<16x128xf32, #tpu.memory_space<vmem>>, vector<16x128xf32>
      %23 = arith.mulf %20, %22 : vector<16x128xf32>
      %cst = arith.constant 0.000000e+00 : f32
      %24 = vector.broadcast %cst : f32 to vector<16x128xf32>
      %25 = arith.maximumf %20, %24 : vector<16x128xf32>
      %26 = arith.subf %25, %23 : vector<16x128xf32>
      %27 = math.absf %20 : vector<16x128xf32>
      %cst_9 = arith.constant 0.000000e+00 : f32
      %28 = vector.broadcast %cst_9 : f32 to vector<16x128xf32>
      %29 = arith.subf %28, %27 : vector<16x128xf32>
      %30 = math.exp %29 : vector<16x128xf32>
      %31 = math.log1p %30 : vector<16x128xf32>
      %32 = arith.addf %26, %31 : vector<16x128xf32>
      %cst_10 = arith.constant 0.000000e+00 : f32
      %33 = vector.broadcast %cst_10 : f32 to vector<16x128xf32>
      %34 = arith.cmpf oeq, %22, %33 : vector<16x128xf32>
      %35 = arith.extui %34 : vector<16x128xi1> to vector<16x128xi32>
      %36 = arith.sitofp %35 : vector<16x128xi32> to vector<16x128xf32>
      %cst_11 = arith.constant 1.000000e+00 : f32
      %37 = vector.broadcast %cst_11 : f32 to vector<16x128xf32>
      %38 = arith.cmpf oeq, %22, %37 : vector<16x128xf32>
      %39 = arith.extui %38 : vector<16x128xi1> to vector<16x128xi32>
      %40 = arith.sitofp %39 : vector<16x128xi32> to vector<16x128xf32>
      %c0_12 = arith.constant 0 : index
      %c0_13 = arith.constant 0 : index
      %c0_14 = arith.constant 0 : index
      %41 = vector.load %arg6[%c0_12, %c0_13, %c0_14] : memref<6x8x128xf32, #tpu.memory_space<vmem>>, vector<1x8x128xf32>
      %42 = vector.shape_cast %41 : vector<1x8x128xf32> to vector<8x128xf32>
      %43 = vector.shape_cast %23 : vector<16x128xf32> to vector<2x8x128xf32>
      %cst_15 = arith.constant dense<0.000000e+00> : vector<8x128xf32>
      %44 = vector.multi_reduction <add>, %43, %cst_15 [0] : vector<2x8x128xf32> to vector<8x128xf32>
      %45 = arith.addf %42, %44 : vector<8x128xf32>
      %c0_16 = arith.constant 0 : index
      %c0_17 = arith.constant 0 : index
      %c0_18 = arith.constant 0 : index
      %46 = vector.load %arg6[%c0_16, %c0_17, %c0_18] : memref<6x8x128xf32, #tpu.memory_space<vmem>>, vector<1x8x128xf32>
      %47 = vector.shape_cast %46 : vector<1x8x128xf32> to vector<8x128xf32>
      %48 = vector.shape_cast %45 : vector<8x128xf32> to vector<1x8x128xf32>
      tpu.vector_store %arg6[%c0_16, %c0_17, %c0_18], %48 {strides = array<i32>} : memref<6x8x128xf32, #tpu.memory_space<vmem>>, vector<1x8x128xf32>,
      %c1 = arith.constant 1 : index
      %c0_19 = arith.constant 0 : index
      %c0_20 = arith.constant 0 : index
      %49 = vector.load %arg6[%c1, %c0_19, %c0_20] : memref<6x8x128xf32, #tpu.memory_space<vmem>>, vector<1x8x128xf32>
      %50 = vector.shape_cast %49 : vector<1x8x128xf32> to vector<8x128xf32>
      %51 = vector.shape_cast %20 : vector<16x128xf32> to vector<2x8x128xf32>
      %cst_21 = arith.constant dense<0.000000e+00> : vector<8x128xf32>
      %52 = vector.multi_reduction <add>, %51, %cst_21 [0] : vector<2x8x128xf32> to vector<8x128xf32>
      %53 = arith.addf %50, %52 : vector<8x128xf32>
      %c1_22 = arith.constant 1 : index
      %c0_23 = arith.constant 0 : index
      %c0_24 = arith.constant 0 : index
      %54 = vector.load %arg6[%c1_22, %c0_23, %c0_24] : memref<6x8x128xf32, #tpu.memory_space<vmem>>, vector<1x8x128xf32>
      %55 = vector.shape_cast %54 : vector<1x8x128xf32> to vector<8x128xf32>
      %56 = vector.shape_cast %53 : vector<8x128xf32> to vector<1x8x128xf32>
      tpu.vector_store %arg6[%c1_22, %c0_23, %c0_24], %56 {strides = array<i32>} : memref<6x8x128xf32, #tpu.memory_space<vmem>>, vector<1x8x128xf32>,
      %c2 = arith.constant 2 : index
      %c0_25 = arith.constant 0 : index
      %c0_26 = arith.constant 0 : index
      %57 = vector.load %arg6[%c2, %c0_25, %c0_26] : memref<6x8x128xf32, #tpu.memory_space<vmem>>, vector<1x8x128xf32>
      %58 = vector.shape_cast %57 : vector<1x8x128xf32> to vector<8x128xf32>
      %59 = vector.shape_cast %22 : vector<16x128xf32> to vector<2x8x128xf32>
      %cst_27 = arith.constant dense<0.000000e+00> : vector<8x128xf32>
      %60 = vector.multi_reduction <add>, %59, %cst_27 [0] : vector<2x8x128xf32> to vector<8x128xf32>
      %61 = arith.addf %58, %60 : vector<8x128xf32>
      %c2_28 = arith.constant 2 : index
      %c0_29 = arith.constant 0 : index
      %c0_30 = arith.constant 0 : index
      %62 = vector.load %arg6[%c2_28, %c0_29, %c0_30] : memref<6x8x128xf32, #tpu.memory_space<vmem>>, vector<1x8x128xf32>
      %63 = vector.shape_cast %62 : vector<1x8x128xf32> to vector<8x128xf32>
      %64 = vector.shape_cast %61 : vector<8x128xf32> to vector<1x8x128xf32>
      tpu.vector_store %arg6[%c2_28, %c0_29, %c0_30], %64 {strides = array<i32>} : memref<6x8x128xf32, #tpu.memory_space<vmem>>, vector<1x8x128xf32>,
      %c3 = arith.constant 3 : index
      %c0_31 = arith.constant 0 : index
      %c0_32 = arith.constant 0 : index
      %65 = vector.load %arg6[%c3, %c0_31, %c0_32] : memref<6x8x128xf32, #tpu.memory_space<vmem>>, vector<1x8x128xf32>
      %66 = vector.shape_cast %65 : vector<1x8x128xf32> to vector<8x128xf32>
      %67 = vector.shape_cast %32 : vector<16x128xf32> to vector<2x8x128xf32>
      %cst_33 = arith.constant dense<0.000000e+00> : vector<8x128xf32>
      %68 = vector.multi_reduction <add>, %67, %cst_33 [0] : vector<2x8x128xf32> to vector<8x128xf32>
      %69 = arith.addf %66, %68 : vector<8x128xf32>
      %c3_34 = arith.constant 3 : index
      %c0_35 = arith.constant 0 : index
      %c0_36 = arith.constant 0 : index
      %70 = vector.load %arg6[%c3_34, %c0_35, %c0_36] : memref<6x8x128xf32, #tpu.memory_space<vmem>>, vector<1x8x128xf32>
      %71 = vector.shape_cast %70 : vector<1x8x128xf32> to vector<8x128xf32>
      %72 = vector.shape_cast %69 : vector<8x128xf32> to vector<1x8x128xf32>
      tpu.vector_store %arg6[%c3_34, %c0_35, %c0_36], %72 {strides = array<i32>} : memref<6x8x128xf32, #tpu.memory_space<vmem>>, vector<1x8x128xf32>,
      %c4 = arith.constant 4 : index
      %c0_37 = arith.constant 0 : index
      %c0_38 = arith.constant 0 : index
      %73 = vector.load %arg6[%c4, %c0_37, %c0_38] : memref<6x8x128xf32, #tpu.memory_space<vmem>>, vector<1x8x128xf32>
      %74 = vector.shape_cast %73 : vector<1x8x128xf32> to vector<8x128xf32>
      %75 = vector.shape_cast %36 : vector<16x128xf32> to vector<2x8x128xf32>
      %cst_39 = arith.constant dense<0.000000e+00> : vector<8x128xf32>
      %76 = vector.multi_reduction <add>, %75, %cst_39 [0] : vector<2x8x128xf32> to vector<8x128xf32>
      %77 = arith.addf %74, %76 : vector<8x128xf32>
      %c4_40 = arith.constant 4 : index
      %c0_41 = arith.constant 0 : index
      %c0_42 = arith.constant 0 : index
      %78 = vector.load %arg6[%c4_40, %c0_41, %c0_42] : memref<6x8x128xf32, #tpu.memory_space<vmem>>, vector<1x8x128xf32>
      %79 = vector.shape_cast %78 : vector<1x8x128xf32> to vector<8x128xf32>
      %80 = vector.shape_cast %77 : vector<8x128xf32> to vector<1x8x128xf32>
      tpu.vector_store %arg6[%c4_40, %c0_41, %c0_42], %80 {strides = array<i32>} : memref<6x8x128xf32, #tpu.memory_space<vmem>>, vector<1x8x128xf32>,
      %c5 = arith.constant 5 : index
      %c0_43 = arith.constant 0 : index
      %c0_44 = arith.constant 0 : index
      %81 = vector.load %arg6[%c5, %c0_43, %c0_44] : memref<6x8x128xf32, #tpu.memory_space<vmem>>, vector<1x8x128xf32>
      %82 = vector.shape_cast %81 : vector<1x8x128xf32> to vector<8x128xf32>
      %83 = vector.shape_cast %40 : vector<16x128xf32> to vector<2x8x128xf32>
      %cst_45 = arith.constant dense<0.000000e+00> : vector<8x128xf32>
      %84 = vector.multi_reduction <add>, %83, %cst_45 [0] : vector<2x8x128xf32> to vector<8x128xf32>
      %85 = arith.addf %82, %84 : vector<8x128xf32>
      %c5_46 = arith.constant 5 : index
      %c0_47 = arith.constant 0 : index
      %c0_48 = arith.constant 0 : index
      %86 = vector.load %arg6[%c5_46, %c0_47, %c0_48] : memref<6x8x128xf32, #tpu.memory_space<vmem>>, vector<1x8x128xf32>
      %87 = vector.shape_cast %86 : vector<1x8x128xf32> to vector<8x128xf32>
      %88 = vector.shape_cast %85 : vector<8x128xf32> to vector<1x8x128xf32>
      tpu.vector_store %arg6[%c5_46, %c0_47, %c0_48], %88 {strides = array<i32>} : memref<6x8x128xf32, #tpu.memory_space<vmem>>, vector<1x8x128xf32>,
      %c1_i32_49 = arith.constant 1 : i32
    } else {
    }
    %true = arith.constant true
    %11 = arith.xori %8, %true : i1
    %12 = arith.extui %11 : i1 to i32
    %c0_i32_3 = arith.constant 0 : i32
    %13 = arith.cmpi ne, %12, %c0_i32_3 : i32
    scf.if %13 {
      %c0_i32_6 = arith.constant 0 : i32
      %c16_i32 = arith.constant 16 : i32
      %17 = arith.muli %c0_i32_6, %c16_i32 : i32
      %18 = tpu.assume_multiple %17, 16 : i32
      %19 = arith.index_cast %18 : i32 to index
      %c0_7 = arith.constant 0 : index
      %20 = vector.load %arg3[%19, %c0_7] : memref<16x128xf32, #tpu.memory_space<vmem>>, vector<16x128xf32>
      %21 = arith.index_cast %18 : i32 to index
      %c0_8 = arith.constant 0 : index
      %22 = vector.load %arg4[%21, %c0_8] : memref<16x128xf32, #tpu.memory_space<vmem>>, vector<16x128xf32>
      %23 = arith.mulf %20, %22 : vector<16x128xf32>
      %cst = arith.constant 0.000000e+00 : f32
      %24 = vector.broadcast %cst : f32 to vector<16x128xf32>
      %25 = arith.maximumf %20, %24 : vector<16x128xf32>
      %26 = arith.subf %25, %23 : vector<16x128xf32>
      %27 = math.absf %20 : vector<16x128xf32>
      %cst_9 = arith.constant 0.000000e+00 : f32
      %28 = vector.broadcast %cst_9 : f32 to vector<16x128xf32>
      %29 = arith.subf %28, %27 : vector<16x128xf32>
      %30 = math.exp %29 : vector<16x128xf32>
      %31 = math.log1p %30 : vector<16x128xf32>
      %32 = arith.addf %26, %31 : vector<16x128xf32>
      %cst_10 = arith.constant 0.000000e+00 : f32
      %33 = vector.broadcast %cst_10 : f32 to vector<16x128xf32>
      %34 = arith.cmpf oeq, %22, %33 : vector<16x128xf32>
      %35 = arith.extui %34 : vector<16x128xi1> to vector<16x128xi32>
      %36 = arith.sitofp %35 : vector<16x128xi32> to vector<16x128xf32>
      %cst_11 = arith.constant 1.000000e+00 : f32
      %37 = vector.broadcast %cst_11 : f32 to vector<16x128xf32>
      %38 = arith.cmpf oeq, %22, %37 : vector<16x128xf32>
      %39 = arith.extui %38 : vector<16x128xi1> to vector<16x128xi32>
      %40 = arith.sitofp %39 : vector<16x128xi32> to vector<16x128xf32>
      %41 = tpu.iota {dimensions = array<i32: 0>} : vector<16x128xi32>
      %42 = tpu.iota {dimensions = array<i32: 1>} : vector<16x128xi32>
      %c16_i32_12 = arith.constant 16 : i32
      %43 = arith.muli %4, %c16_i32_12 : i32
      %44 = arith.addi %43, %18 : i32
      %45 = vector.broadcast %44 : i32 to vector<16x128xi32>
      %46 = arith.addi %45, %41 : vector<16x128xi32>
      %c128_i32 = arith.constant 128 : i32
      %47 = vector.broadcast %c128_i32 : i32 to vector<16x128xi32>
      %48 = arith.muli %46, %47 : vector<16x128xi32>
      %49 = arith.addi %48, %42 : vector<16x128xi32>
      %50 = vector.broadcast %5 : i32 to vector<16x128xi32>
      %51 = arith.cmpi slt, %49, %50 : vector<16x128xi32>
      %cst_13 = arith.constant 0.000000e+00 : f32
      %52 = vector.broadcast %cst_13 : f32 to vector<16x128xf32>
      %53 = arith.select %51, %23, %52 : vector<16x128xi1>, vector<16x128xf32>
      %cst_14 = arith.constant 0.000000e+00 : f32
      %54 = vector.broadcast %cst_14 : f32 to vector<16x128xf32>
      %55 = arith.select %51, %20, %54 : vector<16x128xi1>, vector<16x128xf32>
      %cst_15 = arith.constant 0.000000e+00 : f32
      %56 = vector.broadcast %cst_15 : f32 to vector<16x128xf32>
      %57 = arith.select %51, %22, %56 : vector<16x128xi1>, vector<16x128xf32>
      %cst_16 = arith.constant 0.000000e+00 : f32
      %58 = vector.broadcast %cst_16 : f32 to vector<16x128xf32>
      %59 = arith.select %51, %32, %58 : vector<16x128xi1>, vector<16x128xf32>
      %cst_17 = arith.constant 0.000000e+00 : f32
      %60 = vector.broadcast %cst_17 : f32 to vector<16x128xf32>
      %61 = arith.select %51, %36, %60 : vector<16x128xi1>, vector<16x128xf32>
      %cst_18 = arith.constant 0.000000e+00 : f32
      %62 = vector.broadcast %cst_18 : f32 to vector<16x128xf32>
      %63 = arith.select %51, %40, %62 : vector<16x128xi1>, vector<16x128xf32>
      %c0_19 = arith.constant 0 : index
      %c0_20 = arith.constant 0 : index
      %c0_21 = arith.constant 0 : index
      %64 = vector.load %arg6[%c0_19, %c0_20, %c0_21] : memref<6x8x128xf32, #tpu.memory_space<vmem>>, vector<1x8x128xf32>
      %65 = vector.shape_cast %64 : vector<1x8x128xf32> to vector<8x128xf32>
      %66 = vector.shape_cast %53 : vector<16x128xf32> to vector<2x8x128xf32>
      %cst_22 = arith.constant dense<0.000000e+00> : vector<8x128xf32>
      %67 = vector.multi_reduction <add>, %66, %cst_22 [0] : vector<2x8x128xf32> to vector<8x128xf32>
      %68 = arith.addf %65, %67 : vector<8x128xf32>
      %c0_23 = arith.constant 0 : index
      %c0_24 = arith.constant 0 : index
      %c0_25 = arith.constant 0 : index
      %69 = vector.load %arg6[%c0_23, %c0_24, %c0_25] : memref<6x8x128xf32, #tpu.memory_space<vmem>>, vector<1x8x128xf32>
      %70 = vector.shape_cast %69 : vector<1x8x128xf32> to vector<8x128xf32>
      %71 = vector.shape_cast %68 : vector<8x128xf32> to vector<1x8x128xf32>
      tpu.vector_store %arg6[%c0_23, %c0_24, %c0_25], %71 {strides = array<i32>} : memref<6x8x128xf32, #tpu.memory_space<vmem>>, vector<1x8x128xf32>,
      %c1 = arith.constant 1 : index
      %c0_26 = arith.constant 0 : index
      %c0_27 = arith.constant 0 : index
      %72 = vector.load %arg6[%c1, %c0_26, %c0_27] : memref<6x8x128xf32, #tpu.memory_space<vmem>>, vector<1x8x128xf32>
      %73 = vector.shape_cast %72 : vector<1x8x128xf32> to vector<8x128xf32>
      %74 = vector.shape_cast %55 : vector<16x128xf32> to vector<2x8x128xf32>
      %cst_28 = arith.constant dense<0.000000e+00> : vector<8x128xf32>
      %75 = vector.multi_reduction <add>, %74, %cst_28 [0] : vector<2x8x128xf32> to vector<8x128xf32>
      %76 = arith.addf %73, %75 : vector<8x128xf32>
      %c1_29 = arith.constant 1 : index
      %c0_30 = arith.constant 0 : index
      %c0_31 = arith.constant 0 : index
      %77 = vector.load %arg6[%c1_29, %c0_30, %c0_31] : memref<6x8x128xf32, #tpu.memory_space<vmem>>, vector<1x8x128xf32>
      %78 = vector.shape_cast %77 : vector<1x8x128xf32> to vector<8x128xf32>
      %79 = vector.shape_cast %76 : vector<8x128xf32> to vector<1x8x128xf32>
      tpu.vector_store %arg6[%c1_29, %c0_30, %c0_31], %79 {strides = array<i32>} : memref<6x8x128xf32, #tpu.memory_space<vmem>>, vector<1x8x128xf32>,
      %c2 = arith.constant 2 : index
      %c0_32 = arith.constant 0 : index
      %c0_33 = arith.constant 0 : index
      %80 = vector.load %arg6[%c2, %c0_32, %c0_33] : memref<6x8x128xf32, #tpu.memory_space<vmem>>, vector<1x8x128xf32>
      %81 = vector.shape_cast %80 : vector<1x8x128xf32> to vector<8x128xf32>
      %82 = vector.shape_cast %57 : vector<16x128xf32> to vector<2x8x128xf32>
      %cst_34 = arith.constant dense<0.000000e+00> : vector<8x128xf32>
      %83 = vector.multi_reduction <add>, %82, %cst_34 [0] : vector<2x8x128xf32> to vector<8x128xf32>
      %84 = arith.addf %81, %83 : vector<8x128xf32>
      %c2_35 = arith.constant 2 : index
      %c0_36 = arith.constant 0 : index
      %c0_37 = arith.constant 0 : index
      %85 = vector.load %arg6[%c2_35, %c0_36, %c0_37] : memref<6x8x128xf32, #tpu.memory_space<vmem>>, vector<1x8x128xf32>
      %86 = vector.shape_cast %85 : vector<1x8x128xf32> to vector<8x128xf32>
      %87 = vector.shape_cast %84 : vector<8x128xf32> to vector<1x8x128xf32>
      tpu.vector_store %arg6[%c2_35, %c0_36, %c0_37], %87 {strides = array<i32>} : memref<6x8x128xf32, #tpu.memory_space<vmem>>, vector<1x8x128xf32>,
      %c3 = arith.constant 3 : index
      %c0_38 = arith.constant 0 : index
      %c0_39 = arith.constant 0 : index
      %88 = vector.load %arg6[%c3, %c0_38, %c0_39] : memref<6x8x128xf32, #tpu.memory_space<vmem>>, vector<1x8x128xf32>
      %89 = vector.shape_cast %88 : vector<1x8x128xf32> to vector<8x128xf32>
      %90 = vector.shape_cast %59 : vector<16x128xf32> to vector<2x8x128xf32>
      %cst_40 = arith.constant dense<0.000000e+00> : vector<8x128xf32>
      %91 = vector.multi_reduction <add>, %90, %cst_40 [0] : vector<2x8x128xf32> to vector<8x128xf32>
      %92 = arith.addf %89, %91 : vector<8x128xf32>
      %c3_41 = arith.constant 3 : index
      %c0_42 = arith.constant 0 : index
      %c0_43 = arith.constant 0 : index
      %93 = vector.load %arg6[%c3_41, %c0_42, %c0_43] : memref<6x8x128xf32, #tpu.memory_space<vmem>>, vector<1x8x128xf32>
      %94 = vector.shape_cast %93 : vector<1x8x128xf32> to vector<8x128xf32>
      %95 = vector.shape_cast %92 : vector<8x128xf32> to vector<1x8x128xf32>
      tpu.vector_store %arg6[%c3_41, %c0_42, %c0_43], %95 {strides = array<i32>} : memref<6x8x128xf32, #tpu.memory_space<vmem>>, vector<1x8x128xf32>,
      %c4 = arith.constant 4 : index
      %c0_44 = arith.constant 0 : index
      %c0_45 = arith.constant 0 : index
      %96 = vector.load %arg6[%c4, %c0_44, %c0_45] : memref<6x8x128xf32, #tpu.memory_space<vmem>>, vector<1x8x128xf32>
      %97 = vector.shape_cast %96 : vector<1x8x128xf32> to vector<8x128xf32>
      %98 = vector.shape_cast %61 : vector<16x128xf32> to vector<2x8x128xf32>
      %cst_46 = arith.constant dense<0.000000e+00> : vector<8x128xf32>
      %99 = vector.multi_reduction <add>, %98, %cst_46 [0] : vector<2x8x128xf32> to vector<8x128xf32>
      %100 = arith.addf %97, %99 : vector<8x128xf32>
      %c4_47 = arith.constant 4 : index
      %c0_48 = arith.constant 0 : index
      %c0_49 = arith.constant 0 : index
      %101 = vector.load %arg6[%c4_47, %c0_48, %c0_49] : memref<6x8x128xf32, #tpu.memory_space<vmem>>, vector<1x8x128xf32>
      %102 = vector.shape_cast %101 : vector<1x8x128xf32> to vector<8x128xf32>
      %103 = vector.shape_cast %100 : vector<8x128xf32> to vector<1x8x128xf32>
      tpu.vector_store %arg6[%c4_47, %c0_48, %c0_49], %103 {strides = array<i32>} : memref<6x8x128xf32, #tpu.memory_space<vmem>>, vector<1x8x128xf32>,
      %c5 = arith.constant 5 : index
      %c0_50 = arith.constant 0 : index
      %c0_51 = arith.constant 0 : index
      %104 = vector.load %arg6[%c5, %c0_50, %c0_51] : memref<6x8x128xf32, #tpu.memory_space<vmem>>, vector<1x8x128xf32>
      %105 = vector.shape_cast %104 : vector<1x8x128xf32> to vector<8x128xf32>
      %106 = vector.shape_cast %63 : vector<16x128xf32> to vector<2x8x128xf32>
      %cst_52 = arith.constant dense<0.000000e+00> : vector<8x128xf32>
      %107 = vector.multi_reduction <add>, %106, %cst_52 [0] : vector<2x8x128xf32> to vector<8x128xf32>
      %108 = arith.addf %105, %107 : vector<8x128xf32>
      %c5_53 = arith.constant 5 : index
      %c0_54 = arith.constant 0 : index
      %c0_55 = arith.constant 0 : index
      %109 = vector.load %arg6[%c5_53, %c0_54, %c0_55] : memref<6x8x128xf32, #tpu.memory_space<vmem>>, vector<1x8x128xf32>
      %110 = vector.shape_cast %109 : vector<1x8x128xf32> to vector<8x128xf32>
      %111 = vector.shape_cast %108 : vector<8x128xf32> to vector<1x8x128xf32>
      tpu.vector_store %arg6[%c5_53, %c0_54, %c0_55], %111 {strides = array<i32>} : memref<6x8x128xf32, #tpu.memory_space<vmem>>, vector<1x8x128xf32>,
      %c1_i32_56 = arith.constant 1 : i32
    } else {
    }
    %c0_i32_4 = arith.constant 0 : i32
    %14 = arith.cmpi eq, %arg1, %c0_i32_4 : i32
    %15 = arith.extui %14 : i1 to i32
    %c0_i32_5 = arith.constant 0 : i32
    %16 = arith.cmpi ne, %15, %c0_i32_5 : i32
    scf.if %16 {
      %c0_6 = arith.constant 0 : index
      %c0_7 = arith.constant 0 : index
      %c0_8 = arith.constant 0 : index
      %17 = vector.load %arg6[%c0_6, %c0_7, %c0_8] : memref<6x8x128xf32, #tpu.memory_space<vmem>>, vector<6x8x128xf32>
      %c0_9 = arith.constant 0 : index
      %c0_10 = arith.constant 0 : index
      %c0_11 = arith.constant 0 : index
      %c0_12 = arith.constant 0 : index
      %18 = vector.load %arg5[%c0_9, %c0_10, %c0_11, %c0_12] : memref<1x6x8x128xf32, #tpu.memory_space<vmem>>, vector<1x6x8x128xf32>
      %19 = vector.shape_cast %18 : vector<1x6x8x128xf32> to vector<6x8x128xf32>
      %20 = vector.shape_cast %17 : vector<6x8x128xf32> to vector<1x6x8x128xf32>
      tpu.vector_store %arg5[%c0_9, %c0_10, %c0_11, %c0_12], %20 {strides = array<i32>} : memref<1x6x8x128xf32, #tpu.memory_space<vmem>>, vector<1x6x8x128xf32>,
    } else {
    }
    return
  }
  func.func @transform_0(%arg0: i32, %arg1: i32, %arg2: memref<1xi32, #tpu.memory_space<smem>>) -> (i32, i32) {
    %c0_i32 = arith.constant 0 : i32
    %c0_i32_0 = arith.constant 0 : i32
    return %arg1, %c0_i32 : i32, i32
  }
  func.func @transform_1(%arg0: i32, %arg1: i32, %arg2: memref<1xi32, #tpu.memory_space<smem>>) -> (i32, i32) {
    %c0_i32 = arith.constant 0 : i32
    %c0_i32_0 = arith.constant 0 : i32
    return %arg1, %c0_i32 : i32, i32
  }
  func.func @transform_2(%arg0: i32, %arg1: i32, %arg2: memref<1xi32, #tpu.memory_space<smem>>) -> (i32, i32, i32, i32) {
    %c0_i32 = arith.constant 0 : i32
    %c0_i32_0 = arith.constant 0 : i32
    %c0_i32_1 = arith.constant 0 : i32
    %c0_i32_2 = arith.constant 0 : i32
    return %arg0, %c0_i32, %c0_i32_0, %c0_i32_1 : i32, i32, i32, i32
  }
}

</mosaic_0001>

<llo_original>
// kernel: tpu_custom_call.1
$region0: #{tpu_custom_call.1}
  #allocation0 [shape = 'u32[]', space=smem, size = 0x4, offset = 0x4, fixed_abs, tag = 'smem constant byte address 0x4 - core index']
  #allocation1 [shape = 'u32[72,128]{1,0:T(1,128)}', space=vmem, size = 0x9000, scoped, tag = 'internal scratch']
  #allocation2 [shape = 'f32[6,8,128]{2,1,0:T(8,128)}', space=vmem, size = 0x6000, scoped, tag = 'scratch operand']
  #allocation3 [shape = 's32[1]{0}', space=sflag, size = 0x4, scoped, tag = 'scoped memory for tpu_custom_call.1']
  #allocation4 [shape = 's32[1]{0:T(128)S(6)}', space=smem, size = 0x200, scoped, tag = 'prefetched SMEM operand 0']
  %s0 = inlined_call_operand.<no memory space> [shape: s32[1], index: 0, kind: input, shape index: {}]
  %s1 = inlined_call_operand.hbm [shape: f32[16,128], index: 1, kind: input, shape index: {}]
  %s2 = inlined_call_operand.hbm [shape: f32[16,128], index: 2, kind: input, shape index: {}]
  %s3 = inlined_call_operand.hbm [shape: f32[1,6,8,128], index: 3, kind: output, shape index: {}]
  %s4 = sld [smem:[#allocation0]]
  $region42: #{tpu_custom_call.1} parent=0
    _
  %s6 = ssub.s32 1, %s4
  %s7 = scalar_select 0, %s6, %s4
  %8 = sst [smem:[#allocation4]] %s0
  $region1: #{tpu_custom_call.1} parent=0
    #allocation5 [shape = 'u8[8192]{0}', space=vmem, size = 0x2000, scoped, tag = 'input window, operand 1, single buffered']
    #allocation6 [shape = 's32[1]{0}', space=sflag, size = 0x4, scoped, tag = 'scoped memory for tpu_custom_call.1']
    #allocation7 [shape = 's32[1]{0}', space=sflag, size = 0x4, scoped, tag = 'scoped memory for tpu_custom_call.1']
    #allocation8 [shape = 'u8[8192]{0}', space=vmem, size = 0x2000, scoped, tag = 'input window, operand 2, single buffered']
    #allocation9 [shape = 's32[1]{0}', space=sflag, size = 0x4, scoped, tag = 'scoped memory for tpu_custom_call.1']
    #allocation10 [shape = 'u8[24576]{0}', space=vmem, size = 0x6000, scoped, tag = 'output window, operand 0, single buffered']
    %9 = vsyncpa [#allocation6], 0
    %10 = vsyncpa [#allocation9], 0
    %11 = vsyncpa [#allocation7], 0
    // Predicated region
    $region2: #{tpu_custom_call.1} parent=1 // pred_check
      _
    $region3: #{tpu_custom_call.1} parent=1 // pred_check_branch
      %13 = sbr.rel (0) target = $region5
    $region4: #{tpu_custom_call.1} parent=1 // pred_region
      %15 = vsyncadd [#allocation6], 0
      %s16 = sshll.u32 %s1, 4
      %s17 = int_to_ptr.hbm [resolvable:$true] %s16
      %s18 = sshll.u32 [#allocation5], 4
      %s19 = int_to_ptr.vmem [resolvable:$true] %s18
      %24 = dma.hbm_to_vmem [thread:$0]  %s17, 256, %s19, [#allocation6], 128, 128, 8
    $region5: #{tpu_custom_call.1} parent=1 // pred_fallthru
      _
    // Predicated region
    $region6: #{tpu_custom_call.1} parent=1 // pred_check
      _
    $region7: #{tpu_custom_call.1} parent=1 // pred_check_branch
      %26 = sbr.rel (0) target = $region9
    $region8: #{tpu_custom_call.1} parent=1 // pred_region
      %28 = vsyncadd [#allocation9], 0
      %s29 = sshll.u32 %s2, 4
      %s30 = int_to_ptr.hbm [resolvable:$true] %s29
      %s31 = sshll.u32 [#allocation8], 4
      %s32 = int_to_ptr.vmem [resolvable:$true] %s31
      %37 = dma.hbm_to_vmem [thread:$0]  %s30, 256, %s32, [#allocation9], 128, 128, 8
    $region9: #{tpu_custom_call.1} parent=1 // pred_fallthru
      _
    // Predicated region
    $region10: #{tpu_custom_call.1} parent=1 // pred_check
      _
    $region11: #{tpu_custom_call.1} parent=1 // pred_check_branch
      %39 = sbr.rel (0) target = $region13
    $region12: #{tpu_custom_call.1} parent=1 // pred_region
      %41 = dma.done [#allocation6], 256
    $region13: #{tpu_custom_call.1} parent=1 // pred_fallthru
      _
    // Predicated region
    $region14: #{tpu_custom_call.1} parent=1 // pred_check
      _
    $region15: #{tpu_custom_call.1} parent=1 // pred_check_branch
      %43 = sbr.rel (0) target = $region17
    $region16: #{tpu_custom_call.1} parent=1 // pred_region
      %45 = dma.done [#allocation9], 256
    $region17: #{tpu_custom_call.1} parent=1 // pred_fallthru
      _
    %p46 = scmp.eq.s32.totalorder 0, 0
    // Predicated region
    $region18: #{tpu_custom_call.1} parent=1 // pred_check
      %p47 = pneg %p46
    $region19: #{tpu_custom_call.1} parent=1 // pred_check_branch
      %49 = sbr.rel (%p47) target = $region21
    $region20: #{tpu_custom_call.1} parent=1 // pred_region
      %50 = vst [vmem:[#allocation2] sm:$0xff] 0.0
      %51 = vst [vmem:[#allocation2 + $0x8] sm:$0xff] 0.0
      %52 = vst [vmem:[#allocation2 + $0x10] sm:$0xff] 0.0
      %53 = vst [vmem:[#allocation2 + $0x18] sm:$0xff] 0.0
      %54 = vst [vmem:[#allocation2 + $0x20] sm:$0xff] 0.0
      %55 = vst [vmem:[#allocation2 + $0x28] sm:$0xff] 0.0
    $region21: #{tpu_custom_call.1} parent=1 // pred_fallthru
      _
    %s56 = sadd.s32 0, 0
    %s57 = sld [smem:[#allocation4]]
    %s58 = sadd.s32 %s56, 1
    %s59 = smul.u32 %s58, 2048
    %p60 = scmp.le.s32.totalorder %s59, %s57
    // Predicated region
    $region22: #{tpu_custom_call.1} parent=1 // pred_check
      %p61 = pneg %p60
    $region23: #{tpu_custom_call.1} parent=1 // pred_check_branch
      %63 = sbr.rel (%p61) target = $region25
    $region24: #{tpu_custom_call.1} parent=1 // pred_region
      %v64 = vld [vmem:[#allocation5] sm:$0xff]
      %v65 = vld [vmem:[#allocation5 + $0x8] sm:$0xff]
      %v66 = vld [vmem:[#allocation8] sm:$0xff]
      %v67 = vld [vmem:[#allocation8 + $0x8] sm:$0xff]
      %v68 = vmul.f32 %v64, %v66
      %v69 = vmul.f32 %v65, %v67
      %v70 = vmax.f32 %v64, 0.0
      %v71 = vmax.f32 %v65, 0.0
      %v72 = vsub.f32 %v70, %v68
      %v73 = vsub.f32 %v71, %v69
      %v74 = vand.u32 2147483647, %v64
      %v75 = vand.u32 2147483647, %v65
      %v76 = vsub.f32 0.0, %v74
      %v77 = vsub.f32 0.0, %v75
      %v78 = vmul.f32 %v76, 1.442695
      %v79 = vpow.pop %v78
      %v80 = vmul.f32 %v77, 1.442695
      %v81 = vpow.pop %v80
      %v82 = vadd.f32 %v79, 1.0
      %v83 = vlog2.pop %v82
      %v84 = vmul.f32 %v83, 0.6931472
      %v85 = vmul.f32 -0.5, %v79
      %v86 = vadd.f32 %v85, 1.0
      %v87 = vmul.f32 %v86, %v79
      %v88 = vand.u32 2147483647, %v79
      %vm89 = vcmp.lt.f32.partialorder %v88, 0.0004427343
      %v90 = vsel %vm89, %v87, %v84
      %v91 = vadd.f32 %v81, 1.0
      %v92 = vlog2.pop %v91
      %v93 = vmul.f32 %v92, 0.6931472
      %v94 = vmul.f32 -0.5, %v81
      %v95 = vadd.f32 %v94, 1.0
      %v96 = vmul.f32 %v95, %v81
      %v97 = vand.u32 2147483647, %v81
      %vm98 = vcmp.lt.f32.partialorder %v97, 0.0004427343
      %v99 = vsel %vm98, %v96, %v93
      %v100 = vadd.f32 %v72, %v90
      %v101 = vadd.f32 %v73, %v99
      %vm102 = vcmp.eq.f32.partialorder %v66, 0.0
      %vm103 = vcmp.eq.f32.partialorder %v67, 0.0
      %v104 = vsel %vm102, 1, 0
      %v105 = vsel %vm103, 1, 0
      %v106 = vcvt.s32.f32 %v104
      %v107 = vcvt.s32.f32 %v105
      %vm108 = vcmp.eq.f32.partialorder %v66, 1.0
      %vm109 = vcmp.eq.f32.partialorder %v67, 1.0
      %v110 = vsel %vm108, 1, 0
      %v111 = vsel %vm109, 1, 0
      %v112 = vcvt.s32.f32 %v110
      %v113 = vcvt.s32.f32 %v111
      %v114 = vld [vmem:[#allocation2] sm:$0xff]
      %v115 = vadd.f32 %v68, %v69
      %v116 = vadd.f32 %v114, %v115
      %117 = vst [vmem:[#allocation2] sm:$0xff] %v116
      %s118 = scalar_lea.vmem [#allocation2], 8
      %v119 = vld [vmem:[%s118] sm:$0xff]
      %v120 = vadd.f32 %v64, %v65
      %v121 = vadd.f32 %v119, %v120
      %122 = vst [vmem:[%s118] sm:$0xff] %v121
      %s123 = scalar_lea.vmem [#allocation2], 16
      %v124 = vld [vmem:[%s123] sm:$0xff]
      %v125 = vadd.f32 %v66, %v67
      %v126 = vadd.f32 %v124, %v125
      %127 = vst [vmem:[%s123] sm:$0xff] %v126
      %s128 = scalar_lea.vmem [#allocation2], 24
      %v129 = vld [vmem:[%s128] sm:$0xff]
      %v130 = vadd.f32 %v100, %v101
      %v131 = vadd.f32 %v129, %v130
      %132 = vst [vmem:[%s128] sm:$0xff] %v131
      %s133 = scalar_lea.vmem [#allocation2], 32
      %v134 = vld [vmem:[%s133] sm:$0xff]
      %v135 = vadd.f32 %v106, %v107
      %v136 = vadd.f32 %v134, %v135
      %137 = vst [vmem:[%s133] sm:$0xff] %v136
      %s138 = scalar_lea.vmem [#allocation2], 40
      %v139 = vld [vmem:[%s138] sm:$0xff]
      %v140 = vadd.f32 %v112, %v113
      %v141 = vadd.f32 %v139, %v140
      %142 = vst [vmem:[%s138] sm:$0xff] %v141
    $region25: #{tpu_custom_call.1} parent=1 // pred_fallthru
      _
    %p143 = scmp.gt.s32.totalorder %s59, %s57
    // Predicated region
    $region26: #{tpu_custom_call.1} parent=1 // pred_check
      %p144 = pneg %p143
    $region27: #{tpu_custom_call.1} parent=1 // pred_check_branch
      %146 = sbr.rel (%p144) target = $region29
    $region28: #{tpu_custom_call.1} parent=1 // pred_region
      %v147 = vld [vmem:[#allocation5] sm:$0xff]
      %v148 = vld [vmem:[#allocation5 + $0x8] sm:$0xff]
      %v149 = vld [vmem:[#allocation8] sm:$0xff]
      %v150 = vld [vmem:[#allocation8 + $0x8] sm:$0xff]
      %v151 = vmul.f32 %v147, %v149
      %v152 = vmul.f32 %v148, %v150
      %v153 = vmax.f32 %v147, 0.0
      %v154 = vmax.f32 %v148, 0.0
      %v155 = vsub.f32 %v153, %v151
      %v156 = vsub.f32 %v154, %v152
      %v157 = vand.u32 2147483647, %v147
      %v158 = vand.u32 2147483647, %v148
      %v159 = vsub.f32 0.0, %v157
      %v160 = vsub.f32 0.0, %v158
      %v161 = vmul.f32 %v159, 1.442695
      %v162 = vpow.pop %v161
      %v163 = vmul.f32 %v160, 1.442695
      %v164 = vpow.pop %v163
      %v165 = vadd.f32 %v162, 1.0
      %v166 = vlog2.pop %v165
      %v167 = vmul.f32 %v166, 0.6931472
      %v168 = vmul.f32 -0.5, %v162
      %v169 = vadd.f32 %v168, 1.0
      %v170 = vmul.f32 %v169, %v162
      %v171 = vand.u32 2147483647, %v162
      %vm172 = vcmp.lt.f32.partialorder %v171, 0.0004427343
      %v173 = vsel %vm172, %v170, %v167
      %v174 = vadd.f32 %v164, 1.0
      %v175 = vlog2.pop %v174
      %v176 = vmul.f32 %v175, 0.6931472
      %v177 = vmul.f32 -0.5, %v164
      %v178 = vadd.f32 %v177, 1.0
      %v179 = vmul.f32 %v178, %v164
      %v180 = vand.u32 2147483647, %v164
      %vm181 = vcmp.lt.f32.partialorder %v180, 0.0004427343
      %v182 = vsel %vm181, %v179, %v176
      %v183 = vadd.f32 %v155, %v173
      %v184 = vadd.f32 %v156, %v182
      %vm185 = vcmp.eq.f32.partialorder %v149, 0.0
      %vm186 = vcmp.eq.f32.partialorder %v150, 0.0
      %v187 = vsel %vm185, 1, 0
      %v188 = vsel %vm186, 1, 0
      %v189 = vcvt.s32.f32 %v187
      %v190 = vcvt.s32.f32 %v188
      %vm191 = vcmp.eq.f32.partialorder %v149, 1.0
      %vm192 = vcmp.eq.f32.partialorder %v150, 1.0
      %v193 = vsel %vm191, 1, 0
      %v194 = vsel %vm192, 1, 0
      %v195 = vcvt.s32.f32 %v193
      %v196 = vcvt.s32.f32 %v194
      %v197 = vlaneseq
      %v198 = vshrl.u32 %v197, 7
      %v199 = vadd.s32 %v198, 8
      %v200 = vlaneseq
      %v201 = vand.u32 %v200, 127
      %s202 = smul.u32 %s56, 16
      %s203 = sadd.s32 %s202, 0
      %v204 = vstv %s203
      %v205 = vadd.s32 %v204, %v198
      %v206 = vadd.s32 %v204, %v199
      %v207 = vmul.u32 %v205, 128
      %v208 = vmul.u32 %v206, 128
      %v209 = vadd.s32 %v207, %v201
      %v210 = vadd.s32 %v208, %v201
      %v211 = vstv %s57
      %vm212 = vcmp.lt.s32.totalorder %v209, %v211
      %vm213 = vcmp.lt.s32.totalorder %v210, %v211
      %v214 = vsel %vm212, %v151, 0.0
      %v215 = vsel %vm213, %v152, 0.0
      %v216 = vsel %vm212, %v147, 0.0
      %v217 = vsel %vm213, %v148, 0.0
      %v218 = vsel %vm212, %v149, 0.0
      %v219 = vsel %vm213, %v150, 0.0
      %v220 = vsel %vm212, %v183, 0.0
      %v221 = vsel %vm213, %v184, 0.0
      %v222 = vsel %vm212, %v189, 0.0
      %v223 = vsel %vm213, %v190, 0.0
      %v224 = vsel %vm212, %v195, 0.0
      %v225 = vsel %vm213, %v196, 0.0
      %v226 = vld [vmem:[#allocation2] sm:$0xff]
      %v227 = vadd.f32 %v214, %v215
      %v228 = vadd.f32 %v226, %v227
      %229 = vst [vmem:[#allocation2] sm:$0xff] %v228
      %s230 = scalar_lea.vmem [#allocation2], 8
      %v231 = vld [vmem:[%s230] sm:$0xff]
      %v232 = vadd.f32 %v216, %v217
      %v233 = vadd.f32 %v231, %v232
      %234 = vst [vmem:[%s230] sm:$0xff] %v233
      %s235 = scalar_lea.vmem [#allocation2], 16
      %v236 = vld [vmem:[%s235] sm:$0xff]
      %v237 = vadd.f32 %v218, %v219
      %v238 = vadd.f32 %v236, %v237
      %239 = vst [vmem:[%s235] sm:$0xff] %v238
      %s240 = scalar_lea.vmem [#allocation2], 24
      %v241 = vld [vmem:[%s240] sm:$0xff]
      %v242 = vadd.f32 %v220, %v221
      %v243 = vadd.f32 %v241, %v242
      %244 = vst [vmem:[%s240] sm:$0xff] %v243
      %s245 = scalar_lea.vmem [#allocation2], 32
      %v246 = vld [vmem:[%s245] sm:$0xff]
      %v247 = vadd.f32 %v222, %v223
      %v248 = vadd.f32 %v246, %v247
      %249 = vst [vmem:[%s245] sm:$0xff] %v248
      %s250 = scalar_lea.vmem [#allocation2], 40
      %v251 = vld [vmem:[%s250] sm:$0xff]
      %v252 = vadd.f32 %v224, %v225
      %v253 = vadd.f32 %v251, %v252
      %254 = vst [vmem:[%s250] sm:$0xff] %v253
    $region29: #{tpu_custom_call.1} parent=1 // pred_fallthru
      _
    // Predicated region
    $region30: #{tpu_custom_call.1} parent=1 // pred_check
      %p255 = pneg %p46
    $region31: #{tpu_custom_call.1} parent=1 // pred_check_branch
      %257 = sbr.rel (%p255) target = $region33
    $region32: #{tpu_custom_call.1} parent=1 // pred_region
      %v258 = vld [vmem:[#allocation2] sm:$0xff]
      %v259 = vld [vmem:[#allocation2 + $0x8] sm:$0xff]
      %v260 = vld [vmem:[#allocation2 + $0x10] sm:$0xff]
      %v261 = vld [vmem:[#allocation2 + $0x18] sm:$0xff]
      %v262 = vld [vmem:[#allocation2 + $0x20] sm:$0xff]
      %v263 = vld [vmem:[#allocation2 + $0x28] sm:$0xff]
      %264 = vst [vmem:[#allocation10] sm:$0xff] %v258
      %265 = vst [vmem:[#allocation10 + $0x8] sm:$0xff] %v259
      %266 = vst [vmem:[#allocation10 + $0x10] sm:$0xff] %v260
      %267 = vst [vmem:[#allocation10 + $0x18] sm:$0xff] %v261
      %268 = vst [vmem:[#allocation10 + $0x20] sm:$0xff] %v262
      %269 = vst [vmem:[#allocation10 + $0x28] sm:$0xff] %v263
    $region33: #{tpu_custom_call.1} parent=1 // pred_fallthru
      _
    // Predicated region
    $region34: #{tpu_custom_call.1} parent=1 // pred_check
      _
    $region35: #{tpu_custom_call.1} parent=1 // pred_check_branch
      %271 = sbr.rel (0) target = $region37
    $region36: #{tpu_custom_call.1} parent=1 // pred_region
      %273 = vsyncadd [#allocation7], 0
      %s274 = sshll.u32 [#allocation10], 4
      %s275 = int_to_ptr.vmem [resolvable:$true] %s274
      %s276 = sshll.u32 %s3, 4
      %s277 = int_to_ptr.hbm [resolvable:$true] %s276
      %282 = dma.vmem_to_hbm [thread:$0]  %s275, 768, %s277, [#allocation7], 128, 128, 8
    $region37: #{tpu_custom_call.1} parent=1 // pred_fallthru
      _
    // Predicated region
    $region38: #{tpu_custom_call.1} parent=1 // pred_check
      _
    $region39: #{tpu_custom_call.1} parent=1 // pred_check_branch
      %284 = sbr.rel (0) target = $region41
    $region40: #{tpu_custom_call.1} parent=1 // pred_region
      %286 = dma.done [#allocation7], 768
    $region41: #{tpu_custom_call.1} parent=1 // pred_fallthru
      _
    %287 = vsyncpa [#allocation6], 1
    %288 = vsyncpa [#allocation9], 1
    %289 = vsyncpa [#allocation7], 1

</llo_original>
